<compile_context>
chip_gen: v6e
topology: v6e:2x2x1
jax: 0.10.0
libtpu: 0.0.40
codegen_flags: <defaults>
</compile_context>

<pallas_src>
import functools
import math

import jax
import jax.numpy as jnp
from jax import lax
from jax.experimental import pallas as pl
from jax.experimental.pallas import tpu as pltpu


def _round_up(x, m):
    return (x + m - 1) // m * m


# ------------------------------ fused kernel ------------------------------- #
def _encoder2d_kernel(x_ref,
                      w1_ref, b1_ref, w2_ref, b2_ref,
                      w3_ref, b3_ref, w4_ref, b4_ref,
                      wh_ref, bh_ref, out_ref, *, bt, h0, w0):
    # x_ref block: (1, C_pad, bt*h0*w0).  Columns are bit-interleaved so that
    # for every layer the 4 conv taps are contiguous column blocks of width
    # sc = bt * (h/2) * (w/2), each ordered exactly like that layer's output.
    a = x_ref[0]                                            # (C_pad, bt*h0*w0)
    h, w = h0, w0
    for w_ref, b_ref in ((w1_ref, b1_ref), (w2_ref, b2_ref),
                         (w3_ref, b3_ref), (w4_ref, b4_ref)):
        hc, wc = h // 2, w // 2
        sc = bt * hc * wc
        # Sublane-stack the 4 contiguous tap slices -> one well-shaped GEMM
        # with K = 4*C_pad instead of 4 tiny K=C GEMMs + VALU adds.
        patch = jnp.concatenate(
            [a[:, t * sc:(t + 1) * sc] for t in range(4)], axis=0)  # (4*C_pad, sc)
        y = jnp.dot(w_ref[...], patch,
                    preferred_element_type=jnp.float32)             # (OC_pad, sc)
        a = jnp.tanh(y + b_ref[...])        # bias (OC_pad, 1) broadcasts on lanes
        h, w = hc, wc

    # Fused linear heads: out = [W1; W2] @ flat + [b1; b2]  -> (2L, bt).
    nn = h * w                              # final spatial positions per sample
    # Columns of `a` are (spatial q, batch) with batch fastest, so this reshape
    # yields torch's flatten order (c*nn + q) on sublanes (identity when nn==1).
    flat = a.reshape(a.shape[0] * nn, bt)                   # (16*nn, bt)
    out = jnp.dot(wh_ref[...], flat,
                  preferred_element_type=jnp.float32) + bh_ref[...]
    out_ref[0] = out.astype(out_ref.dtype)


# ------------------------- wrapper-side data layout ------------------------ #
def _space_to_depth_columns(x, num_tiles, c_pad):
    """(B, C, H, W) -> (num_tiles, c_pad, (B/num_tiles)*H*W).

    Column order (per tile): tap bits of level 1, level 2, level 3, level 4,
    then the residual spatial position, then batch (lane-fastest).  This makes
    every layer's 2x2/stride-2 tap a contiguous static lane slice in-kernel.
    Done once per call in XLA with rank-8 reshape/transpose passes.
    """
    bsz, c, h, w = x.shape
    bt = bsz // num_tiles
    y = x.reshape(num_tiles, bt, c, h, w).transpose(0, 2, 3, 4, 1)   # (G,C,H,W,Bt)
    t = 1
    y = y.reshape(num_tiles, c, t, h, w, bt)
    for _ in range(4):
        y = y.reshape(num_tiles, c, t, h // 2, 2, w // 2, 2, bt)
        # (G, C, taps, i', i_k, j', j_k, bt) -> (G, C, taps, i_k, j_k, i', j', bt)
        y = y.transpose(0, 1, 2, 4, 6, 3, 5, 7)
        t, h, w = t * 4, h // 2, w // 2
        y = y.reshape(num_tiles, c, t, h, w, bt)
    a0 = y.reshape(num_tiles, c, t * h * w * bt)
    if c_pad > c:
        a0 = jnp.pad(a0, ((0, 0), (0, c_pad - c), (0, 0)))
    return a0


# --------------------------- parameter handling ---------------------------- #
def init_encoder2d_params(key, in_grid_size, latent_dimension):
    n = int(in_grid_size * 2 ** (-4))
    params = {}
    conv_specs = [("down1", 2, 4), ("down2", 4, 8), ("down3", 8, 16), ("down4", 16, 16)]
    for name, ic, oc in conv_specs:
        key, kw, kb = jax.random.split(key, 3)
        bound = 1.0 / math.sqrt(ic * 2 * 2)
        params[name] = (
            jax.random.uniform(kw, (oc, ic, 2, 2), jnp.float32, -bound, bound),
            jax.random.uniform(kb, (oc,), jnp.float32, -bound, bound),
        )
    feat = 16 * n * n
    for name in ("linear1", "linear2"):
        key, kw, kb = jax.random.split(key, 3)
        bound = 1.0 / math.sqrt(feat)
        params[name] = (
            jax.random.uniform(kw, (latent_dimension, feat), jnp.float32, -bound, bound),
            jax.random.uniform(kb, (latent_dimension,), jnp.float32, -bound, bound),
        )
    return params


def pack_encoder2d_params(params):
    """One-time repack of torch-layout params into kernel layouts.

    Conv weight (OC, IC, 2, 2) -> (OC_pad, 4*IC_pad) with column index
    (kh*2 + kw)*IC_pad + c, matching the sublane-stacked patch block.  Channel
    dims are padded with zeros to multiples of 8 (keeps sublane concat aligned
    and avoids wasted vreg rows); padded channels carry tanh(0)=0 and zero
    downstream weights, so results are bit-identical.
    """
    packed = {}
    ic_pad_prev = _round_up(2, 8)                 # padded input-image channels
    for name in ("down1", "down2", "down3", "down4"):
        wgt, b = params[name]                     # (OC, IC, 2, 2), (OC,)
        oc, ic = int(wgt.shape[0]), int(wgt.shape[1])
        ic_pad = ic_pad_prev
        oc_pad = _round_up(oc, 8)
        w_t = jnp.transpose(wgt, (0, 2, 3, 1)).reshape(oc, 4, ic)   # [o, t, c]
        wp = jnp.zeros((oc_pad, 4, ic_pad), jnp.float32)
        wp = wp.at[:oc, :, :ic].set(w_t.astype(jnp.float32)).reshape(oc_pad, 4 * ic_pad)
        bp = jnp.zeros((oc_pad, 1), jnp.float32).at[:oc, 0].set(b.astype(jnp.float32))
        packed[name] = (wp, bp)
        ic_pad_prev = oc_pad
    assert ic_pad_prev == 16, "final conv channel count must stay 16 for the heads"

    w1, b1 = params["linear1"]
    w2, b2 = params["linear2"]
    wh = jnp.concatenate([w1, w2], axis=0).astype(jnp.float32)       # (2L, 16*nn)
    bh = jnp.concatenate([b1, b2], axis=0).reshape(-1, 1).astype(jnp.float32)
    packed["heads"] = (wh, bh)
    return packed


# ------------------------------- forward ----------------------------------- #
def encoder2d_forward(packed, x, *, num_tiles=None):
    bsz, c_in, h, w = x.shape
    assert h % 16 == 0 and w % 16 == 0, "4x stride-2 convs need H, W multiples of 16"
    if num_tiles is None:
        # >=2 steps feeds both v7x TensorCores and enables input-DMA pipelining;
        # raise this for large batches to keep per-step VMEM small.
        num_tiles = 2 if bsz % 2 == 0 and bsz >= 2 else 1
    assert bsz % num_tiles == 0
    bt = bsz // num_tiles

    c_pad = packed["down1"][0].shape[1] // 4
    a0 = _space_to_depth_columns(x, num_tiles, c_pad)      # (G, C_pad, bt*h*w)
    wh, bh = packed["heads"]
    two_l = wh.shape[0]

    args = (a0,
            *packed["down1"], *packed["down2"], *packed["down3"], *packed["down4"],
            wh, bh)

    in_specs = [pl.BlockSpec((1,) + tuple(a0.shape[1:]), lambda g: (g, 0, 0))]
    in_specs += [pl.BlockSpec(tuple(a.shape), lambda g: (0, 0)) for a in args[1:]]
    out_specs = pl.BlockSpec((1, two_l, bt), lambda g: (g, 0, 0))

    # Explicit VMEM budget: double-buffered input tile + resident weights +
    # activation headroom, clamped to the ~48 MiB v7x guidance.
    tile_bytes = (int(a0.size) // num_tiles) * a0.dtype.itemsize
    weight_bytes = sum(int(a.size) * a.dtype.itemsize for a in args[1:])
    vmem_limit = int(max(32 * 2**20,
                         min(48 * 2**20, 4 * tile_bytes + 2 * weight_bytes + (1 << 20))))

    out = pl.pallas_call(
        functools.partial(_encoder2d_kernel, bt=bt, h0=h, w0=w),
        out_shape=jax.ShapeDtypeStruct((num_tiles, two_l, bt), jnp.float32),
        grid=(num_tiles,),
        in_specs=in_specs,
        out_specs=out_specs,
        compiler_params=pltpu.CompilerParams(
            dimension_semantics=("parallel",),
            vmem_limit_bytes=vmem_limit),
    )(*args)

    ms = out.transpose(0, 2, 1).reshape(bsz, two_l)        # (batch, 2L)
    latent = two_l // 2
    return ms[:, :latent], ms[:, latent:]


# ------------------------- pure-JAX reference ------------------------------ #
def encoder2d_reference(params, x):
    for name in ("down1", "down2", "down3", "down4"):
        w, b = params[name]
        y = lax.conv_general_dilated(
            x, w, window_strides=(2, 2), padding="VALID",
            dimension_numbers=("NCHW", "OIHW", "NCHW"))
        x = jnp.tanh(y + b[None, :, None, None])
    flat = x.reshape(x.shape[0], -1)
    w1, b1 = params["linear1"]
    w2, b2 = params["linear2"]
    return flat @ w1.T + b1, flat @ w2.T + b2


if __name__ == "__main__":
    in_grid_size = 16      # -> n = 1, flattened feature dim = 16
    latent_dimension = 8
    batch = 2

    key = jax.random.PRNGKey(0)
    key_x, key_p = jax.random.split(key)
    x = jax.random.normal(key_x, (batch, 2, in_grid_size, in_grid_size), jnp.float32)
    params = init_encoder2d_params(key_p, in_grid_size, latent_dimension)
    packed = pack_encoder2d_params(params)

    fwd = jax.jit(encoder2d_forward)
    m, s = fwd(packed, x)
    m = jax.block_until_ready(m)
    s = jax.block_until_ready(s)

    m_ref, s_ref = encoder2d_reference(params, x)
    assert m.shape == (batch, latent_dimension) and s.shape == (batch, latent_dimension)
    assert jnp.allclose(m, m_ref, atol=1e-3, rtol=1e-3), "m mismatch vs reference"
    assert jnp.allclose(s, s_ref, atol=1e-3, rtol=1e-3), "s mismatch vs reference"

    print("KERNEL_OK")
</pallas_src>

<mosaic_0001>
module attributes {stable_mosaic.version = 11 : i64} {
  func.func @_encoder2d_kernel(%arg0: i32, %arg1: memref<1x8x256xf32, #tpu.memory_space<vmem>>, %arg2: memref<8x32xf32, #tpu.memory_space<vmem>>, %arg3: memref<8x1xf32, #tpu.memory_space<vmem>>, %arg4: memref<8x32xf32, #tpu.memory_space<vmem>>, %arg5: memref<8x1xf32, #tpu.memory_space<vmem>>, %arg6: memref<16x32xf32, #tpu.memory_space<vmem>>, %arg7: memref<16x1xf32, #tpu.memory_space<vmem>>, %arg8: memref<16x64xf32, #tpu.memory_space<vmem>>, %arg9: memref<16x1xf32, #tpu.memory_space<vmem>>, %arg10: memref<16x16xf32, #tpu.memory_space<vmem>>, %arg11: memref<16x1xf32, #tpu.memory_space<vmem>>, %arg12: memref<1x16x1xf32, #tpu.memory_space<vmem>>) attributes {dimension_semantics = [#tpu.dimension_semantics<parallel>], iteration_bounds = array<i64: 2>, scalar_prefetch = 0 : i64, scratch_operands = 0 : i64, tpu.core_type = #tpu.core_type<tc>, window_params = [{transform_indices = @transform_0, window_bounds = array<i64: 1, 8, 256>}, {pipeline_mode = #tpu.pipeline_mode<synchronous>, transform_indices = @transform_1, window_bounds = array<i64: 8, 32>}, {pipeline_mode = #tpu.pipeline_mode<synchronous>, transform_indices = @transform_2, window_bounds = array<i64: 8, 1>}, {pipeline_mode = #tpu.pipeline_mode<synchronous>, transform_indices = @transform_3, window_bounds = array<i64: 8, 32>}, {pipeline_mode = #tpu.pipeline_mode<synchronous>, transform_indices = @transform_4, window_bounds = array<i64: 8, 1>}, {pipeline_mode = #tpu.pipeline_mode<synchronous>, transform_indices = @transform_5, window_bounds = array<i64: 16, 32>}, {pipeline_mode = #tpu.pipeline_mode<synchronous>, transform_indices = @transform_6, window_bounds = array<i64: 16, 1>}, {pipeline_mode = #tpu.pipeline_mode<synchronous>, transform_indices = @transform_7, window_bounds = array<i64: 16, 64>}, {pipeline_mode = #tpu.pipeline_mode<synchronous>, transform_indices = @transform_8, window_bounds = array<i64: 16, 1>}, {pipeline_mode = #tpu.pipeline_mode<synchronous>, transform_indices = @transform_9, window_bounds = array<i64: 16, 16>}, {pipeline_mode = #tpu.pipeline_mode<synchronous>, transform_indices = @transform_10, window_bounds = array<i64: 16, 1>}, {transform_indices = @transform_11, window_bounds = array<i64: 1, 16, 1>}]} {
    %c0 = arith.constant 0 : index
    %c0_0 = arith.constant 0 : index
    %c0_1 = arith.constant 0 : index
    %0 = vector.load %arg1[%c0, %c0_0, %c0_1] : memref<1x8x256xf32, #tpu.memory_space<vmem>>, vector<1x8x256xf32>
    %1 = vector.shape_cast %0 : vector<1x8x256xf32> to vector<8x256xf32>
    %2 = vector.extract_strided_slice %1 {offsets = [0, 0], sizes = [8, 64], strides = [1, 1]} : vector<8x256xf32> to vector<8x64xf32>
    %3 = vector.extract_strided_slice %1 {offsets = [0, 64], sizes = [8, 64], strides = [1, 1]} : vector<8x256xf32> to vector<8x64xf32>
    %4 = vector.extract_strided_slice %1 {offsets = [0, 128], sizes = [8, 64], strides = [1, 1]} : vector<8x256xf32> to vector<8x64xf32>
    %5 = vector.extract_strided_slice %1 {offsets = [0, 192], sizes = [8, 64], strides = [1, 1]} : vector<8x256xf32> to vector<8x64xf32>
    %6 = tpu.concatenate %2, %3, %4, %5 in 0 : vector<8x64xf32>, vector<8x64xf32>, vector<8x64xf32>, vector<8x64xf32> -> vector<32x64xf32>
    %c0_2 = arith.constant 0 : index
    %c0_3 = arith.constant 0 : index
    %7 = vector.load %arg2[%c0_2, %c0_3] : memref<8x32xf32, #tpu.memory_space<vmem>>, vector<8x32xf32>
    %cst = arith.constant dense<0.000000e+00> : vector<8x64xf32>
    %8 = tpu.matmul %7, %6, %cst {dimension_numbers = #tpu.dot_dimension_numbers<[1], [0], [0], [1], [0, 0, 1, 1], [], []>} : vector<8x32xf32>, vector<32x64xf32>, vector<8x64xf32> -> vector<8x64xf32>
    %c0_4 = arith.constant 0 : index
    %c0_5 = arith.constant 0 : index
    %9 = vector.load %arg3[%c0_4, %c0_5] : memref<8x1xf32, #tpu.memory_space<vmem>>, vector<8x1xf32>
    %10 = vector.broadcast %9 : vector<8x1xf32> to vector<8x64xf32>
    %11 = arith.addf %8, %10 : vector<8x64xf32>
    %12 = math.tanh %11 : vector<8x64xf32>
    %13 = vector.extract_strided_slice %12 {offsets = [0, 0], sizes = [8, 16], strides = [1, 1]} : vector<8x64xf32> to vector<8x16xf32>
    %14 = vector.extract_strided_slice %12 {offsets = [0, 16], sizes = [8, 16], strides = [1, 1]} : vector<8x64xf32> to vector<8x16xf32>
    %15 = vector.extract_strided_slice %12 {offsets = [0, 32], sizes = [8, 16], strides = [1, 1]} : vector<8x64xf32> to vector<8x16xf32>
    %16 = vector.extract_strided_slice %12 {offsets = [0, 48], sizes = [8, 16], strides = [1, 1]} : vector<8x64xf32> to vector<8x16xf32>
    %17 = tpu.concatenate %13, %14, %15, %16 in 0 : vector<8x16xf32>, vector<8x16xf32>, vector<8x16xf32>, vector<8x16xf32> -> vector<32x16xf32>
    %c0_6 = arith.constant 0 : index
    %c0_7 = arith.constant 0 : index
    %18 = vector.load %arg4[%c0_6, %c0_7] : memref<8x32xf32, #tpu.memory_space<vmem>>, vector<8x32xf32>
    %cst_8 = arith.constant dense<0.000000e+00> : vector<8x16xf32>
    %19 = tpu.matmul %18, %17, %cst_8 {dimension_numbers = #tpu.dot_dimension_numbers<[1], [0], [0], [1], [0, 0, 1, 1], [], []>} : vector<8x32xf32>, vector<32x16xf32>, vector<8x16xf32> -> vector<8x16xf32>
    %c0_9 = arith.constant 0 : index
    %c0_10 = arith.constant 0 : index
    %20 = vector.load %arg5[%c0_9, %c0_10] : memref<8x1xf32, #tpu.memory_space<vmem>>, vector<8x1xf32>
    %21 = vector.broadcast %20 : vector<8x1xf32> to vector<8x16xf32>
    %22 = arith.addf %19, %21 : vector<8x16xf32>
    %23 = math.tanh %22 : vector<8x16xf32>
    %24 = vector.extract_strided_slice %23 {offsets = [0, 0], sizes = [8, 4], strides = [1, 1]} : vector<8x16xf32> to vector<8x4xf32>
    %25 = vector.extract_strided_slice %23 {offsets = [0, 4], sizes = [8, 4], strides = [1, 1]} : vector<8x16xf32> to vector<8x4xf32>
    %26 = vector.extract_strided_slice %23 {offsets = [0, 8], sizes = [8, 4], strides = [1, 1]} : vector<8x16xf32> to vector<8x4xf32>
    %27 = vector.extract_strided_slice %23 {offsets = [0, 12], sizes = [8, 4], strides = [1, 1]} : vector<8x16xf32> to vector<8x4xf32>
    %28 = tpu.concatenate %24, %25, %26, %27 in 0 : vector<8x4xf32>, vector<8x4xf32>, vector<8x4xf32>, vector<8x4xf32> -> vector<32x4xf32>
    %c0_11 = arith.constant 0 : index
    %c0_12 = arith.constant 0 : index
    %29 = vector.load %arg6[%c0_11, %c0_12] : memref<16x32xf32, #tpu.memory_space<vmem>>, vector<16x32xf32>
    %cst_13 = arith.constant dense<0.000000e+00> : vector<16x4xf32>
    %30 = tpu.matmul %29, %28, %cst_13 {dimension_numbers = #tpu.dot_dimension_numbers<[1], [0], [0], [1], [0, 0, 1, 1], [], []>} : vector<16x32xf32>, vector<32x4xf32>, vector<16x4xf32> -> vector<16x4xf32>
    %c0_14 = arith.constant 0 : index
    %c0_15 = arith.constant 0 : index
    %31 = vector.load %arg7[%c0_14, %c0_15] : memref<16x1xf32, #tpu.memory_space<vmem>>, vector<16x1xf32>
    %32 = vector.broadcast %31 : vector<16x1xf32> to vector<16x4xf32>
    %33 = arith.addf %30, %32 : vector<16x4xf32>
    %34 = math.tanh %33 : vector<16x4xf32>
    %35 = vector.extract_strided_slice %34 {offsets = [0, 0], sizes = [16, 1], strides = [1, 1]} : vector<16x4xf32> to vector<16x1xf32>
    %36 = vector.extract_strided_slice %34 {offsets = [0, 1], sizes = [16, 1], strides = [1, 1]} : vector<16x4xf32> to vector<16x1xf32>
    %37 = vector.extract_strided_slice %34 {offsets = [0, 2], sizes = [16, 1], strides = [1, 1]} : vector<16x4xf32> to vector<16x1xf32>
    %38 = vector.extract_strided_slice %34 {offsets = [0, 3], sizes = [16, 1], strides = [1, 1]} : vector<16x4xf32> to vector<16x1xf32>
    %39 = tpu.concatenate %35, %36, %37, %38 in 0 : vector<16x1xf32>, vector<16x1xf32>, vector<16x1xf32>, vector<16x1xf32> -> vector<64x1xf32>
    %c0_16 = arith.constant 0 : index
    %c0_17 = arith.constant 0 : index
    %40 = vector.load %arg8[%c0_16, %c0_17] : memref<16x64xf32, #tpu.memory_space<vmem>>, vector<16x64xf32>
    %cst_18 = arith.constant dense<0.000000e+00> : vector<16x1xf32>
    %41 = tpu.matmul %40, %39, %cst_18 {dimension_numbers = #tpu.dot_dimension_numbers<[1], [0], [0], [1], [0, 0, 1, 1], [], []>} : vector<16x64xf32>, vector<64x1xf32>, vector<16x1xf32> -> vector<16x1xf32>
    %c0_19 = arith.constant 0 : index
    %c0_20 = arith.constant 0 : index
    %42 = vector.load %arg9[%c0_19, %c0_20] : memref<16x1xf32, #tpu.memory_space<vmem>>, vector<16x1xf32>
    %43 = arith.addf %41, %42 : vector<16x1xf32>
    %44 = math.tanh %43 : vector<16x1xf32>
    %c0_21 = arith.constant 0 : index
    %c0_22 = arith.constant 0 : index
    %45 = vector.load %arg10[%c0_21, %c0_22] : memref<16x16xf32, #tpu.memory_space<vmem>>, vector<16x16xf32>
    %cst_23 = arith.constant dense<0.000000e+00> : vector<16x1xf32>
    %46 = tpu.matmul %45, %44, %cst_23 {dimension_numbers = #tpu.dot_dimension_numbers<[1], [0], [0], [1], [0, 0, 1, 1], [], []>} : vector<16x16xf32>, vector<16x1xf32>, vector<16x1xf32> -> vector<16x1xf32>
    %c0_24 = arith.constant 0 : index
    %c0_25 = arith.constant 0 : index
    %47 = vector.load %arg11[%c0_24, %c0_25] : memref<16x1xf32, #tpu.memory_space<vmem>>, vector<16x1xf32>
    %48 = arith.addf %46, %47 : vector<16x1xf32>
    %c0_26 = arith.constant 0 : index
    %c0_27 = arith.constant 0 : index
    %c0_28 = arith.constant 0 : index
    %49 = vector.load %arg12[%c0_26, %c0_27, %c0_28] : memref<1x16x1xf32, #tpu.memory_space<vmem>>, vector<1x16x1xf32>
    %50 = vector.shape_cast %49 : vector<1x16x1xf32> to vector<16x1xf32>
    %51 = vector.shape_cast %48 : vector<16x1xf32> to vector<1x16x1xf32>
    tpu.vector_store %arg12[%c0_26, %c0_27, %c0_28], %51 {strides = array<i32>} : memref<1x16x1xf32, #tpu.memory_space<vmem>>, vector<1x16x1xf32>,
    return
  }
  func.func @transform_0(%arg0: i32) -> (i32, i32, i32) {
    %c0_i32 = arith.constant 0 : i32
    %c0_i32_0 = arith.constant 0 : i32
    %c0_i32_1 = arith.constant 0 : i32
    return %arg0, %c0_i32, %c0_i32_0 : i32, i32, i32
  }
  func.func @transform_1(%arg0: i32) -> (i32, i32) {
    %c0_i32 = arith.constant 0 : i32
    %c0_i32_0 = arith.constant 0 : i32
    %c0_i32_1 = arith.constant 0 : i32
    return %c0_i32, %c0_i32_0 : i32, i32
  }
  func.func @transform_2(%arg0: i32) -> (i32, i32) {
    %c0_i32 = arith.constant 0 : i32
    %c0_i32_0 = arith.constant 0 : i32
    %c0_i32_1 = arith.constant 0 : i32
    return %c0_i32, %c0_i32_0 : i32, i32
  }
  func.func @transform_3(%arg0: i32) -> (i32, i32) {
    %c0_i32 = arith.constant 0 : i32
    %c0_i32_0 = arith.constant 0 : i32
    %c0_i32_1 = arith.constant 0 : i32
    return %c0_i32, %c0_i32_0 : i32, i32
  }
  func.func @transform_4(%arg0: i32) -> (i32, i32) {
    %c0_i32 = arith.constant 0 : i32
    %c0_i32_0 = arith.constant 0 : i32
    %c0_i32_1 = arith.constant 0 : i32
    return %c0_i32, %c0_i32_0 : i32, i32
  }
  func.func @transform_5(%arg0: i32) -> (i32, i32) {
    %c0_i32 = arith.constant 0 : i32
    %c0_i32_0 = arith.constant 0 : i32
    %c0_i32_1 = arith.constant 0 : i32
    return %c0_i32, %c0_i32_0 : i32, i32
  }
  func.func @transform_6(%arg0: i32) -> (i32, i32) {
    %c0_i32 = arith.constant 0 : i32
    %c0_i32_0 = arith.constant 0 : i32
    %c0_i32_1 = arith.constant 0 : i32
    return %c0_i32, %c0_i32_0 : i32, i32
  }
  func.func @transform_7(%arg0: i32) -> (i32, i32) {
    %c0_i32 = arith.constant 0 : i32
    %c0_i32_0 = arith.constant 0 : i32
    %c0_i32_1 = arith.constant 0 : i32
    return %c0_i32, %c0_i32_0 : i32, i32
  }
  func.func @transform_8(%arg0: i32) -> (i32, i32) {
    %c0_i32 = arith.constant 0 : i32
    %c0_i32_0 = arith.constant 0 : i32
    %c0_i32_1 = arith.constant 0 : i32
    return %c0_i32, %c0_i32_0 : i32, i32
  }
  func.func @transform_9(%arg0: i32) -> (i32, i32) {
    %c0_i32 = arith.constant 0 : i32
    %c0_i32_0 = arith.constant 0 : i32
    %c0_i32_1 = arith.constant 0 : i32
    return %c0_i32, %c0_i32_0 : i32, i32
  }
  func.func @transform_10(%arg0: i32) -> (i32, i32) {
    %c0_i32 = arith.constant 0 : i32
    %c0_i32_0 = arith.constant 0 : i32
    %c0_i32_1 = arith.constant 0 : i32
    return %c0_i32, %c0_i32_0 : i32, i32
  }
  func.func @transform_11(%arg0: i32) -> (i32, i32, i32) {
    %c0_i32 = arith.constant 0 : i32
    %c0_i32_0 = arith.constant 0 : i32
    %c0_i32_1 = arith.constant 0 : i32
    return %arg0, %c0_i32, %c0_i32_0 : i32, i32, i32
  }
}

</mosaic_0001>

<llo_original>
// kernel: encoder2d_forward.1
$region0: #{encoder2d_forward.1}
  #allocation0 [shape = 'u32[]', space=smem, size = 0x4, offset = 0x4, fixed_abs, tag = 'smem constant byte address 0x4 - core index']
  #allocation1 [shape = 'u32[144,128]{1,0:T(1,128)}', space=vmem, size = 0x12000, scoped, tag = 'internal scratch']
  %s0 = inlined_call_operand.vmem [shape: f32[2,8,256], index: 0, kind: input, shape index: {}]
  %s1 = inlined_call_operand.vmem [shape: f32[8,32], index: 1, kind: input, shape index: {}]
  %s2 = inlined_call_operand.vmem [shape: f32[8,1], index: 2, kind: input, shape index: {}]
  %s3 = inlined_call_operand.vmem [shape: f32[8,32], index: 3, kind: input, shape index: {}]
  %s4 = inlined_call_operand.vmem [shape: f32[8,1], index: 4, kind: input, shape index: {}]
  %s5 = inlined_call_operand.vmem [shape: f32[16,32], index: 5, kind: input, shape index: {}]
  %s6 = inlined_call_operand.vmem [shape: f32[16,1], index: 6, kind: input, shape index: {}]
  %s7 = inlined_call_operand.vmem [shape: f32[16,64], index: 7, kind: input, shape index: {}]
  %s8 = inlined_call_operand.vmem [shape: f32[16,1], index: 8, kind: input, shape index: {}]
  %s9 = inlined_call_operand.vmem [shape: f32[16,16], index: 9, kind: input, shape index: {}]
  %s10 = inlined_call_operand.vmem [shape: f32[16,1], index: 10, kind: input, shape index: {}]
  %s11 = inlined_call_operand.vmem [shape: f32[2,16,1], index: 11, kind: output, shape index: {}]
  %s12 = sld [smem:[#allocation0]]
  $region77: #{encoder2d_forward.1} parent=0
    _
  %s14 = ssub.s32 1, %s12
  %s15 = scalar_select 0, %s14, %s12
  loop: start=0, step=1, limit=4
  $region2: #{encoder2d_forward.1} parent=0 // loop_pre_header
    _
  $region3: #{encoder2d_forward.1} parent=0 // loop_header
    %s17 = sphi 0, %s21
    %p18 = scmp.ge.s32.totalorder %s17, 4
    %s27 = sphi 0, %s29
    %s30 = sphi 0, %s27
    %s31 = sphi 0, %s30
    %s47 = sphi 0, %s31
    %s51 = sphi 0, %s51
    %s53 = sphi 0, %s51
    %s54 = sphi 0, %s53
    %s68 = sphi 0, %s54
    %s72 = sphi 0, %s72
    %s74 = sphi 0, %s72
    %s75 = sphi 0, %s74
    %s89 = sphi 0, %s75
    %s93 = sphi 0, %s93
    %s95 = sphi 0, %s93
    %s96 = sphi 0, %s95
    %s110 = sphi 0, %s96
    %s114 = sphi 0, %s114
    %s116 = sphi 0, %s114
    %s117 = sphi 0, %s116
    %s131 = sphi 0, %s117
    %s135 = sphi 0, %s135
    %s137 = sphi 0, %s135
    %s138 = sphi 0, %s137
    %s152 = sphi 0, %s138
    %s156 = sphi 0, %s156
    %s158 = sphi 0, %s156
    %s159 = sphi 0, %s158
    %s173 = sphi 0, %s159
    %s177 = sphi 0, %s177
    %s179 = sphi 0, %s177
    %s180 = sphi 0, %s179
    %s194 = sphi 0, %s180
    %s198 = sphi 0, %s198
    %s200 = sphi 0, %s198
    %s201 = sphi 0, %s200
    %s215 = sphi 0, %s201
    %s219 = sphi 0, %s219
    %s221 = sphi 0, %s219
    %s222 = sphi 0, %s221
    %s236 = sphi 0, %s222
    %s240 = sphi 0, %s240
    %s242 = sphi 0, %s240
    %s243 = sphi 0, %s242
    %s257 = sphi 0, %s243
    %s263 = sphi 0, %s265
    %s266 = sphi 0, %s263
    %s267 = sphi 0, %s266
    %s283 = sphi 0, %s267
  $region4: #{encoder2d_forward.1} parent=0 // loop_header_branch
    %20 = sbr.rel (%p18) target = $region8
  $region5: #{encoder2d_forward.1} parent=0 // loop_body
    %s22 = ssub.s32 %s17, 1
    %s23 = ssub.s32 %s17, 2
    %s24 = sadd.s32 %s17, 1
    %s25 = ssub.s32 %s17, %s24
    %p26 = scmp.eq.s32.totalorder %s25, 0
    %s28 = sadd.s32 %s27, 1
    %s29 = scalar_select %p26, %s27, %s28
    %p32 = pneg %p26
    %p33 = scmp.eq.s32.totalorder %s17, 1
    %p34 = por %p32, %p33
    %p35 = scmp.ne.s32.totalorder %s27, %s30
    %p36 = scmp.eq.s32.totalorder %s17, 0
    %p37 = por %p35, %p36
    %p38 = scmp.ne.s32.totalorder %s27, %s30
    %p39 = scmp.eq.s32.totalorder %s22, 1
    %p40 = por %p38, %p39
    %p41 = scmp.ne.s32.totalorder %s30, %s31
    %p42 = scmp.eq.s32.totalorder %s22, 0
    %p43 = por %p41, %p42
    %p44 = scmp.ne.s32.totalorder %s30, %s31
    %p45 = scmp.eq.s32.totalorder %s23, 1
    %p46 = por %p44, %p45
    %p48 = scmp.ne.s32.totalorder %s31, %s47
    %p49 = scmp.eq.s32.totalorder %s23, 0
    %p50 = por %p48, %p49
    %s52 = sadd.s32 %s51, 1
    %p55 = scmp.eq.s32.totalorder %s17, 1
    %p56 = scmp.ne.s32.totalorder %s51, %s53
    %p57 = scmp.eq.s32.totalorder %s17, 0
    %p58 = por %p56, %p57
    %p59 = scmp.ne.s32.totalorder %s51, %s53
    %p60 = scmp.eq.s32.totalorder %s22, 1
    %p61 = por %p59, %p60
    %p62 = scmp.ne.s32.totalorder %s53, %s54
    %p63 = scmp.eq.s32.totalorder %s22, 0
    %p64 = por %p62, %p63
    %p65 = scmp.ne.s32.totalorder %s53, %s54
    %p66 = scmp.eq.s32.totalorder %s23, 1
    %p67 = por %p65, %p66
    %p69 = scmp.ne.s32.totalorder %s54, %s68
    %p70 = scmp.eq.s32.totalorder %s23, 0
    %p71 = por %p69, %p70
    %s73 = sadd.s32 %s72, 1
    %p76 = scmp.eq.s32.totalorder %s17, 1
    %p77 = scmp.ne.s32.totalorder %s72, %s74
    %p78 = scmp.eq.s32.totalorder %s17, 0
    %p79 = por %p77, %p78
    %p80 = scmp.ne.s32.totalorder %s72, %s74
    %p81 = scmp.eq.s32.totalorder %s22, 1
    %p82 = por %p80, %p81
    %p83 = scmp.ne.s32.totalorder %s74, %s75
    %p84 = scmp.eq.s32.totalorder %s22, 0
    %p85 = por %p83, %p84
    %p86 = scmp.ne.s32.totalorder %s74, %s75
    %p87 = scmp.eq.s32.totalorder %s23, 1
    %p88 = por %p86, %p87
    %p90 = scmp.ne.s32.totalorder %s75, %s89
    %p91 = scmp.eq.s32.totalorder %s23, 0
    %p92 = por %p90, %p91
    %s94 = sadd.s32 %s93, 1
    %p97 = scmp.eq.s32.totalorder %s17, 1
    %p98 = scmp.ne.s32.totalorder %s93, %s95
    %p99 = scmp.eq.s32.totalorder %s17, 0
    %p100 = por %p98, %p99
    %p101 = scmp.ne.s32.totalorder %s93, %s95
    %p102 = scmp.eq.s32.totalorder %s22, 1
    %p103 = por %p101, %p102
    %p104 = scmp.ne.s32.totalorder %s95, %s96
    %p105 = scmp.eq.s32.totalorder %s22, 0
    %p106 = por %p104, %p105
    %p107 = scmp.ne.s32.totalorder %s95, %s96
    %p108 = scmp.eq.s32.totalorder %s23, 1
    %p109 = por %p107, %p108
    %p111 = scmp.ne.s32.totalorder %s96, %s110
    %p112 = scmp.eq.s32.totalorder %s23, 0
    %p113 = por %p111, %p112
    %s115 = sadd.s32 %s114, 1
    %p118 = scmp.eq.s32.totalorder %s17, 1
    %p119 = scmp.ne.s32.totalorder %s114, %s116
    %p120 = scmp.eq.s32.totalorder %s17, 0
    %p121 = por %p119, %p120
    %p122 = scmp.ne.s32.totalorder %s114, %s116
    %p123 = scmp.eq.s32.totalorder %s22, 1
    %p124 = por %p122, %p123
    %p125 = scmp.ne.s32.totalorder %s116, %s117
    %p126 = scmp.eq.s32.totalorder %s22, 0
    %p127 = por %p125, %p126
    %p128 = scmp.ne.s32.totalorder %s116, %s117
    %p129 = scmp.eq.s32.totalorder %s23, 1
    %p130 = por %p128, %p129
    %p132 = scmp.ne.s32.totalorder %s117, %s131
    %p133 = scmp.eq.s32.totalorder %s23, 0
    %p134 = por %p132, %p133
    %s136 = sadd.s32 %s135, 1
    %p139 = scmp.eq.s32.totalorder %s17, 1
    %p140 = scmp.ne.s32.totalorder %s135, %s137
    %p141 = scmp.eq.s32.totalorder %s17, 0
    %p142 = por %p140, %p141
    %p143 = scmp.ne.s32.totalorder %s135, %s137
    %p144 = scmp.eq.s32.totalorder %s22, 1
    %p145 = por %p143, %p144
    %p146 = scmp.ne.s32.totalorder %s137, %s138
    %p147 = scmp.eq.s32.totalorder %s22, 0
    %p148 = por %p146, %p147
    %p149 = scmp.ne.s32.totalorder %s137, %s138
    %p150 = scmp.eq.s32.totalorder %s23, 1
    %p151 = por %p149, %p150
    %p153 = scmp.ne.s32.totalorder %s138, %s152
    %p154 = scmp.eq.s32.totalorder %s23, 0
    %p155 = por %p153, %p154
    %s157 = sadd.s32 %s156, 1
    %p160 = scmp.eq.s32.totalorder %s17, 1
    %p161 = scmp.ne.s32.totalorder %s156, %s158
    %p162 = scmp.eq.s32.totalorder %s17, 0
    %p163 = por %p161, %p162
    %p164 = scmp.ne.s32.totalorder %s156, %s158
    %p165 = scmp.eq.s32.totalorder %s22, 1
    %p166 = por %p164, %p165
    %p167 = scmp.ne.s32.totalorder %s158, %s159
    %p168 = scmp.eq.s32.totalorder %s22, 0
    %p169 = por %p167, %p168
    %p170 = scmp.ne.s32.totalorder %s158, %s159
    %p171 = scmp.eq.s32.totalorder %s23, 1
    %p172 = por %p170, %p171
    %p174 = scmp.ne.s32.totalorder %s159, %s173
    %p175 = scmp.eq.s32.totalorder %s23, 0
    %p176 = por %p174, %p175
    %s178 = sadd.s32 %s177, 1
    %p181 = scmp.eq.s32.totalorder %s17, 1
    %p182 = scmp.ne.s32.totalorder %s177, %s179
    %p183 = scmp.eq.s32.totalorder %s17, 0
    %p184 = por %p182, %p183
    %p185 = scmp.ne.s32.totalorder %s177, %s179
    %p186 = scmp.eq.s32.totalorder %s22, 1
    %p187 = por %p185, %p186
    %p188 = scmp.ne.s32.totalorder %s179, %s180
    %p189 = scmp.eq.s32.totalorder %s22, 0
    %p190 = por %p188, %p189
    %p191 = scmp.ne.s32.totalorder %s179, %s180
    %p192 = scmp.eq.s32.totalorder %s23, 1
    %p193 = por %p191, %p192
    %p195 = scmp.ne.s32.totalorder %s180, %s194
    %p196 = scmp.eq.s32.totalorder %s23, 0
    %p197 = por %p195, %p196
    %s199 = sadd.s32 %s198, 1
    %p202 = scmp.eq.s32.totalorder %s17, 1
    %p203 = scmp.ne.s32.totalorder %s198, %s200
    %p204 = scmp.eq.s32.totalorder %s17, 0
    %p205 = por %p203, %p204
    %p206 = scmp.ne.s32.totalorder %s198, %s200
    %p207 = scmp.eq.s32.totalorder %s22, 1
    %p208 = por %p206, %p207
    %p209 = scmp.ne.s32.totalorder %s200, %s201
    %p210 = scmp.eq.s32.totalorder %s22, 0
    %p211 = por %p209, %p210
    %p212 = scmp.ne.s32.totalorder %s200, %s201
    %p213 = scmp.eq.s32.totalorder %s23, 1
    %p214 = por %p212, %p213
    %p216 = scmp.ne.s32.totalorder %s201, %s215
    %p217 = scmp.eq.s32.totalorder %s23, 0
    %p218 = por %p216, %p217
    %s220 = sadd.s32 %s219, 1
    %p223 = scmp.eq.s32.totalorder %s17, 1
    %p224 = scmp.ne.s32.totalorder %s219, %s221
    %p225 = scmp.eq.s32.totalorder %s17, 0
    %p226 = por %p224, %p225
    %p227 = scmp.ne.s32.totalorder %s219, %s221
    %p228 = scmp.eq.s32.totalorder %s22, 1
    %p229 = por %p227, %p228
    %p230 = scmp.ne.s32.totalorder %s221, %s222
    %p231 = scmp.eq.s32.totalorder %s22, 0
    %p232 = por %p230, %p231
    %p233 = scmp.ne.s32.totalorder %s221, %s222
    %p234 = scmp.eq.s32.totalorder %s23, 1
    %p235 = por %p233, %p234
    %p237 = scmp.ne.s32.totalorder %s222, %s236
    %p238 = scmp.eq.s32.totalorder %s23, 0
    %p239 = por %p237, %p238
    %s241 = sadd.s32 %s240, 1
    %p244 = scmp.eq.s32.totalorder %s17, 1
    %p245 = scmp.ne.s32.totalorder %s240, %s242
    %p246 = scmp.eq.s32.totalorder %s17, 0
    %p247 = por %p245, %p246
    %p248 = scmp.ne.s32.totalorder %s240, %s242
    %p249 = scmp.eq.s32.totalorder %s22, 1
    %p250 = por %p248, %p249
    %p251 = scmp.ne.s32.totalorder %s242, %s243
    %p252 = scmp.eq.s32.totalorder %s22, 0
    %p253 = por %p251, %p252
    %p254 = scmp.ne.s32.totalorder %s242, %s243
    %p255 = scmp.eq.s32.totalorder %s23, 1
    %p256 = por %p254, %p255
    %p258 = scmp.ne.s32.totalorder %s243, %s257
    %p259 = scmp.eq.s32.totalorder %s23, 0
    %p260 = por %p258, %p259
    %s261 = ssub.s32 %s17, %s24
    %p262 = scmp.eq.s32.totalorder %s261, 0
    %s264 = sadd.s32 %s263, 1
    %s265 = scalar_select %p262, %s263, %s264
    %p268 = pneg %p262
    %p269 = scmp.eq.s32.totalorder %s17, 1
    %p270 = por %p268, %p269
    %p271 = scmp.ne.s32.totalorder %s263, %s266
    %p272 = scmp.eq.s32.totalorder %s17, 0
    %p273 = por %p271, %p272
    %p274 = scmp.ne.s32.totalorder %s263, %s266
    %p275 = scmp.eq.s32.totalorder %s22, 1
    %p276 = por %p274, %p275
    %p277 = scmp.ne.s32.totalorder %s266, %s267
    %p278 = scmp.eq.s32.totalorder %s22, 0
    %p279 = por %p277, %p278
    %p280 = scmp.ne.s32.totalorder %s266, %s267
    %p281 = scmp.eq.s32.totalorder %s23, 1
    %p282 = por %p280, %p281
    %p284 = scmp.ne.s32.totalorder %s267, %s283
    %p285 = scmp.eq.s32.totalorder %s23, 0
    %p286 = por %p284, %p285
    %p287 = scmp.le.s32.totalorder 1, %s17
    %p288 = scmp.lt.s32.totalorder %s17, 3
    %p289 = pnand %p287, %p288
    %p290 = pneg %p289
    // Predicated region
    $region9: #{encoder2d_forward.1} parent=5 // pred_check
      _
    $region10: #{encoder2d_forward.1} parent=5 // pred_check_branch
      %292 = sbr.rel (%p289) target = $region12
    $region11: #{encoder2d_forward.1} parent=5 // pred_region
      %s293 = ssub.s32 %s17, 1
      // Predicated region
      $region13: #{encoder2d_forward.1} parent=11 // pred_check
        %p294 = pneg %p64
      $region14: #{encoder2d_forward.1} parent=11 // pred_check_branch
        %296 = sbr.rel (%p294) target = $region16
      $region15: #{encoder2d_forward.1} parent=11 // pred_region
        _
      $region16: #{encoder2d_forward.1} parent=11 // pred_fallthru
        _
      // Predicated region
      $region17: #{encoder2d_forward.1} parent=11 // pred_check
        %p297 = pneg %p85
      $region18: #{encoder2d_forward.1} parent=11 // pred_check_branch
        %299 = sbr.rel (%p297) target = $region20
      $region19: #{encoder2d_forward.1} parent=11 // pred_region
        _
      $region20: #{encoder2d_forward.1} parent=11 // pred_fallthru
        _
      // Predicated region
      $region21: #{encoder2d_forward.1} parent=11 // pred_check
        %p300 = pneg %p106
      $region22: #{encoder2d_forward.1} parent=11 // pred_check_branch
        %302 = sbr.rel (%p300) target = $region24
      $region23: #{encoder2d_forward.1} parent=11 // pred_region
        _
      $region24: #{encoder2d_forward.1} parent=11 // pred_fallthru
        _
      // Predicated region
      $region25: #{encoder2d_forward.1} parent=11 // pred_check
        %p303 = pneg %p127
      $region26: #{encoder2d_forward.1} parent=11 // pred_check_branch
        %305 = sbr.rel (%p303) target = $region28
      $region27: #{encoder2d_forward.1} parent=11 // pred_region
        _
      $region28: #{encoder2d_forward.1} parent=11 // pred_fallthru
        _
      // Predicated region
      $region29: #{encoder2d_forward.1} parent=11 // pred_check
        %p306 = pneg %p148
      $region30: #{encoder2d_forward.1} parent=11 // pred_check_branch
        %308 = sbr.rel (%p306) target = $region32
      $region31: #{encoder2d_forward.1} parent=11 // pred_region
        _
      $region32: #{encoder2d_forward.1} parent=11 // pred_fallthru
        _
      // Predicated region
      $region33: #{encoder2d_forward.1} parent=11 // pred_check
        %p309 = pneg %p169
      $region34: #{encoder2d_forward.1} parent=11 // pred_check_branch
        %311 = sbr.rel (%p309) target = $region36
      $region35: #{encoder2d_forward.1} parent=11 // pred_region
        _
      $region36: #{encoder2d_forward.1} parent=11 // pred_fallthru
        _
      // Predicated region
      $region37: #{encoder2d_forward.1} parent=11 // pred_check
        %p312 = pneg %p190
      $region38: #{encoder2d_forward.1} parent=11 // pred_check_branch
        %314 = sbr.rel (%p312) target = $region40
      $region39: #{encoder2d_forward.1} parent=11 // pred_region
        _
      $region40: #{encoder2d_forward.1} parent=11 // pred_fallthru
        _
      // Predicated region
      $region41: #{encoder2d_forward.1} parent=11 // pred_check
        %p315 = pneg %p211
      $region42: #{encoder2d_forward.1} parent=11 // pred_check_branch
        %317 = sbr.rel (%p315) target = $region44
      $region43: #{encoder2d_forward.1} parent=11 // pred_region
        _
      $region44: #{encoder2d_forward.1} parent=11 // pred_fallthru
        _
      // Predicated region
      $region45: #{encoder2d_forward.1} parent=11 // pred_check
        %p318 = pneg %p232
      $region46: #{encoder2d_forward.1} parent=11 // pred_check_branch
        %320 = sbr.rel (%p318) target = $region48
      $region47: #{encoder2d_forward.1} parent=11 // pred_region
        _
      $region48: #{encoder2d_forward.1} parent=11 // pred_fallthru
        _
      // Predicated region
      $region49: #{encoder2d_forward.1} parent=11 // pred_check
        %p321 = pneg %p253
      $region50: #{encoder2d_forward.1} parent=11 // pred_check_branch
        %323 = sbr.rel (%p321) target = $region52
      $region51: #{encoder2d_forward.1} parent=11 // pred_region
        _
      $region52: #{encoder2d_forward.1} parent=11 // pred_fallthru
        _
    $region12: #{encoder2d_forward.1} parent=5 // pred_fallthru
      _
    %p324 = scmp.lt.s32.totalorder %s17, 2
    // Predicated region
    $region53: #{encoder2d_forward.1} parent=5 // pred_check
      %p325 = pneg %p324
    $region54: #{encoder2d_forward.1} parent=5 // pred_check_branch
      %327 = sbr.rel (%p325) target = $region56
    $region55: #{encoder2d_forward.1} parent=5 // pred_region
      // Predicated region
      $region57: #{encoder2d_forward.1} parent=55 // pred_check
        %p328 = pneg %p37
      $region58: #{encoder2d_forward.1} parent=55 // pred_check_branch
        %330 = sbr.rel (%p328) target = $region60
      $region59: #{encoder2d_forward.1} parent=55 // pred_region
        %p331 = scmp.lt.s32.totalorder %s17, 1
        %s332 = scalar_select %p331, %s17, 1
        %s333 = smul.addr %s332, 2
        %s334 = smul.addr %s333, 8
        %s335 = scalar_lea.vmem %s0, %s334
      $region60: #{encoder2d_forward.1} parent=55 // pred_fallthru
        _
    $region56: #{encoder2d_forward.1} parent=5 // pred_fallthru
      _
    %p336 = scmp.le.s32.totalorder 1, %s17
    %p337 = scmp.lt.s32.totalorder %s17, 3
    %p338 = pnand %p336, %p337
    %p339 = pneg %p338
    // Predicated region
    $region61: #{encoder2d_forward.1} parent=5 // pred_check
      _
    $region62: #{encoder2d_forward.1} parent=5 // pred_check_branch
      %341 = sbr.rel (%p338) target = $region64
    $region63: #{encoder2d_forward.1} parent=5 // pred_region
      %s342 = ssub.s32 %s17, 1
      %p343 = scmp.lt.s32.totalorder %s22, 1
      %s344 = scalar_select %p343, %s22, 1
      %s345 = smul.addr %s344, 2
      %s346 = smul.addr %s345, 8
      %s347 = scalar_lea.vmem %s0, %s346
      %p348 = pneg %p43
      %p349 = pneg %p40
      %p350 = pneg %p64
      %p351 = pneg %p61
      %p352 = pneg %p85
      %p353 = pneg %p82
      %p354 = pneg %p106
      %p355 = pneg %p103
      %p356 = pneg %p127
      %p357 = pneg %p124
      %p358 = pneg %p148
      %p359 = pneg %p145
      %p360 = pneg %p169
      %p361 = pneg %p166
      %p362 = pneg %p190
      %p363 = pneg %p187
      %p364 = pneg %p211
      %p365 = pneg %p208
      %p366 = pneg %p232
      %p367 = pneg %p229
      %p368 = pneg %p253
      %p369 = pneg %p250
      %p370 = pneg %p279
      %p371 = pneg %p276
      %p372 = scmp.lt.s32.totalorder %s22, 1
      %s373 = scalar_select %p372, %s22, 1
      %s374 = smul.addr %s373, 2
      %s375 = smul.addr %s374, 8
      %s376 = scalar_lea.vmem %s11, %s375
      %p377 = scmp.lt.s32.totalorder %s22, 1
      %s378 = scalar_select %p377, %s22, 1
      %s379 = smul.addr %s378, 2
      %s380 = smul.addr %s379, 8
      %s381 = scalar_lea.vmem %s0, %s380
      %p382 = scmp.lt.s32.totalorder %s22, 1
      %s383 = scalar_select %p382, %s22, 1
      %s384 = smul.addr %s383, 2
      %s385 = smul.addr %s384, 8
      %s386 = scalar_lea.vmem %s11, %s385
      %v387 = vld [vmem:[%s381] sm:$0xff]
      %v388 = vld [vmem:[%s381 + $0x8] sm:$0xff]
      %390 = vrot.lane.b32.xlu0 %v387, 64
      %v391 = vpop.permute.xlu0 %390
      %394 = vrot.lane.b32.xlu0 %v388, 64
      %v395 = vpop.permute.xlu0 %394
      %v397 = vld [vmem:[%s1] sm:$0xff]
      %v398 = vld [vmem:[%s2] sm:$0xff]
      %400 = vset.pattern.permute.xlu0 0
      %401 = vperm.xlu0 %400, %v398
      %v402 = vpop.permute.xlu0 %401
      %vm404 = vcmask 261120
      %v406 = vsel %vm404, %v397, 0
      %408 = vmatprep.subr.mxu0 0.0
      %409 = vmatpush1.msra.mxu0 0.0
      %410 = vmatprep.subr.mxu0 0.0
      %411 = vmatpush1.msra.mxu0 0.0
      %412 = vmatprep.subr.mxu0 0.0
      %413 = vmatpush1.msra.mxu0 0.0
      %414 = vmatprep.subr.mxu0 0.0
      %415 = vmatpush1.msra.mxu0 0.0
      %416 = vmatprep.subr.mxu0 0.0
      %417 = vmatpush1.msra.mxu0 0.0
      %418 = vmatprep.subr.mxu0 0.0
      %419 = vmatpush1.msra.mxu0 0.0
      %420 = vmatprep.subr.mxu0 0.0
      %421 = vmatpush1.msra.mxu0 0.0
      %422 = vmatprep.subr.mxu0 0.0
      %423 = vmatpush1.msra.mxu0 0.0
      %424 = vmatprep.subr.mxu0 0.0
      %425 = vmatpush1.msra.mxu0 0.0
      %426 = vmatprep.subr.mxu0 0.0
      %427 = vmatpush1.msra.mxu0 0.0
      %428 = vmatprep.subr.mxu0 0.0
      %429 = vmatpush1.msra.mxu0 0.0
      %430 = vmatprep.subr.mxu0 0.0
      %431 = vmatpush1.msra.mxu0 0.0
      %432 = vmatprep.subr.mxu0 0.0
      %433 = vmatpush1.msra.mxu0 %v395
      %434 = vmatprep.subr.mxu0 0.0
      %435 = vmatpush1.msra.mxu0 %v388
      %436 = vmatprep.subr.mxu0 0.0
      %437 = vmatpush1.msra.mxu0 %v391
      %438 = vmatprep.subr.mxu0 0.0
      %439 = vmatpush1.msra.mxu0 %v387
      %440 = vmatprep.subr.mxu0 0.0
      %441 = vmatpush2.msra.mxu0 0.0
      %442 = vmatprep.subr.mxu0 0.0
      %443 = vmatpush2.msra.mxu0 0.0
      %444 = vmatprep.subr.mxu0 0.0
      %445 = vmatpush2.msra.mxu0 0.0
      %446 = vmatprep.subr.mxu0 0.0
      %447 = vmatpush2.msra.mxu0 0.0
      %448 = vmatprep.subr.mxu0 0.0
      %449 = vmatpush2.msra.mxu0 0.0
      %450 = vmatprep.subr.mxu0 0.0
      %451 = vmatpush2.msra.mxu0 0.0
      %452 = vmatprep.subr.mxu0 0.0
      %453 = vmatpush2.msra.mxu0 0.0
      %454 = vmatprep.subr.mxu0 0.0
      %455 = vmatpush2.msra.mxu0 0.0
      %456 = vmatprep.subr.mxu0 0.0
      %457 = vmatpush2.msra.mxu0 0.0
      %458 = vmatprep.subr.mxu0 0.0
      %459 = vmatpush2.msra.mxu0 0.0
      %460 = vmatprep.subr.mxu0 0.0
      %461 = vmatpush2.msra.mxu0 0.0
      %462 = vmatprep.subr.mxu0 0.0
      %463 = vmatpush2.msra.mxu0 0.0
      %464 = vmatprep.subr.mxu0 0.0
      %465 = vmatpush2.msra.mxu0 0.0
      %466 = vmatprep.subr.mxu0 0.0
      %467 = vmatpush2.msra.mxu0 0.0
      %468 = vmatprep.subr.mxu0 0.0
      %469 = vmatpush2.msra.mxu0 0.0
      %470 = vmatprep.subr.mxu0 0.0
      %471 = vmatpush2.msra.mxu0 0.0
      %472 = vmatprep.mubr.f32.mxu0 0.0
      %473 = vmatmul.mubr.f32.gmra.mxu0 %v406
      %v474 = vpop.f32.mrf.mxu0
      %v475 = vadd.f32 %v402, %v474
      %v476 = vpop.f32.mrf.mxu0
      %477 = vdwg.mxu0
      %v478 = vtanh.pop %v475
      %480 = vrot.lane.b32.xlu0 %v478, 112
      %v481 = vpop.permute.xlu0 %480
      %483 = vrot.lane.b32.xlu0 %v478, 96
      %v484 = vpop.permute.xlu0 %483
      %486 = vrot.lane.b32.xlu0 %v478, 80
      %v487 = vpop.permute.xlu0 %486
      %v489 = vld [vmem:[%s3] sm:$0xff]
      %v490 = vld [vmem:[%s4] sm:$0xff]
      %492 = vset.pattern.permute.xlu0 0
      %493 = vperm.xlu0 %492, %v490
      %v494 = vpop.permute.xlu0 %493
      %v497 = vsel %vm404, %v489, 0
      %499 = vmatprep.subr.mxu0 0.0
      %500 = vmatpush1.msra.mxu0 0.0
      %501 = vmatprep.subr.mxu0 0.0
      %502 = vmatpush1.msra.mxu0 0.0
      %503 = vmatprep.subr.mxu0 0.0
      %504 = vmatpush1.msra.mxu0 0.0
      %505 = vmatprep.subr.mxu0 0.0
      %506 = vmatpush1.msra.mxu0 0.0
      %507 = vmatprep.subr.mxu0 0.0
      %508 = vmatpush1.msra.mxu0 0.0
      %509 = vmatprep.subr.mxu0 0.0
      %510 = vmatpush1.msra.mxu0 0.0
      %511 = vmatprep.subr.mxu0 0.0
      %512 = vmatpush1.msra.mxu0 0.0
      %513 = vmatprep.subr.mxu0 0.0
      %514 = vmatpush1.msra.mxu0 0.0
      %515 = vmatprep.subr.mxu0 0.0
      %516 = vmatpush1.msra.mxu0 0.0
      %517 = vmatprep.subr.mxu0 0.0
      %518 = vmatpush1.msra.mxu0 0.0
      %519 = vmatprep.subr.mxu0 0.0
      %520 = vmatpush1.msra.mxu0 0.0
      %521 = vmatprep.subr.mxu0 0.0
      %522 = vmatpush1.msra.mxu0 0.0
      %523 = vmatprep.subr.mxu0 0.0
      %524 = vmatpush1.msra.mxu0 %v487
      %525 = vmatprep.subr.mxu0 0.0
      %526 = vmatpush1.msra.mxu0 %v484
      %527 = vmatprep.subr.mxu0 0.0
      %528 = vmatpush1.msra.mxu0 %v481
      %529 = vmatprep.subr.mxu0 0.0
      %530 = vmatpush1.msra.mxu0 %v478
      %531 = vmatprep.subr.mxu0 0.0
      %532 = vmatpush2.msra.mxu0 0.0
      %533 = vmatprep.subr.mxu0 0.0
      %534 = vmatpush2.msra.mxu0 0.0
      %535 = vmatprep.subr.mxu0 0.0
      %536 = vmatpush2.msra.mxu0 0.0
      %537 = vmatprep.subr.mxu0 0.0
      %538 = vmatpush2.msra.mxu0 0.0
      %539 = vmatprep.subr.mxu0 0.0
      %540 = vmatpush2.msra.mxu0 0.0
      %541 = vmatprep.subr.mxu0 0.0
      %542 = vmatpush2.msra.mxu0 0.0
      %543 = vmatprep.subr.mxu0 0.0
      %544 = vmatpush2.msra.mxu0 0.0
      %545 = vmatprep.subr.mxu0 0.0
      %546 = vmatpush2.msra.mxu0 0.0
      %547 = vmatprep.subr.mxu0 0.0
      %548 = vmatpush2.msra.mxu0 0.0
      %549 = vmatprep.subr.mxu0 0.0
      %550 = vmatpush2.msra.mxu0 0.0
      %551 = vmatprep.subr.mxu0 0.0
      %552 = vmatpush2.msra.mxu0 0.0
      %553 = vmatprep.subr.mxu0 0.0
      %554 = vmatpush2.msra.mxu0 0.0
      %555 = vmatprep.subr.mxu0 0.0
      %556 = vmatpush2.msra.mxu0 0.0
      %557 = vmatprep.subr.mxu0 0.0
      %558 = vmatpush2.msra.mxu0 0.0
      %559 = vmatprep.subr.mxu0 0.0
      %560 = vmatpush2.msra.mxu0 0.0
      %561 = vmatprep.subr.mxu0 0.0
      %562 = vmatpush2.msra.mxu0 0.0
      %563 = vmatprep.mubr.f32.mxu0 0.0
      %564 = vmatmul.mubr.f32.gmra.mxu0 %v497
      %v565 = vpop.f32.mrf.mxu0
      %v566 = vadd.f32 %v494, %v565
      %v567 = vpop.f32.mrf.mxu0
      %568 = vdwg.mxu0
      %v569 = vtanh.pop %v566
      %571 = vrot.lane.b32.xlu0 %v569, 124
      %v572 = vpop.permute.xlu0 %571
      %574 = vrot.lane.b32.xlu0 %v569, 120
      %v575 = vpop.permute.xlu0 %574
      %577 = vrot.lane.b32.xlu0 %v569, 116
      %v578 = vpop.permute.xlu0 %577
      %v580 = vld [vmem:[%s5] sm:$0xff]
      %v581 = vld [vmem:[%s5 + $0x8] sm:$0xff]
      %v582 = vld [vmem:[%s6] sm:$0xff]
      %v583 = vld [vmem:[%s6 + $0x8] sm:$0xff]
      %585 = vset.pattern.permute.xlu0 0
      %586 = vperm.xlu0 %585, %v582
      %v587 = vpop.permute.xlu0 %586
      %590 = vset.pattern.permute.xlu0 0
      %591 = vperm.xlu0 %590, %v583
      %v592 = vpop.permute.xlu0 %591
      %v595 = vsel %vm404, %v580, 0
      %v598 = vsel %vm404, %v581, 0
      %600 = vmatprep.subr.mxu0 0.0
      %601 = vmatpush1.msra.mxu0 0.0
      %602 = vmatprep.subr.mxu0 0.0
      %603 = vmatpush1.msra.mxu0 0.0
      %604 = vmatprep.subr.mxu0 0.0
      %605 = vmatpush1.msra.mxu0 0.0
      %606 = vmatprep.subr.mxu0 0.0
      %607 = vmatpush1.msra.mxu0 0.0
      %608 = vmatprep.subr.mxu0 0.0
      %609 = vmatpush1.msra.mxu0 0.0
      %610 = vmatprep.subr.mxu0 0.0
      %611 = vmatpush1.msra.mxu0 0.0
      %612 = vmatprep.subr.mxu0 0.0
      %613 = vmatpush1.msra.mxu0 0.0
      %614 = vmatprep.subr.mxu0 0.0
      %615 = vmatpush1.msra.mxu0 0.0
      %616 = vmatprep.subr.mxu0 0.0
      %617 = vmatpush1.msra.mxu0 0.0
      %618 = vmatprep.subr.mxu0 0.0
      %619 = vmatpush1.msra.mxu0 0.0
      %620 = vmatprep.subr.mxu0 0.0
      %621 = vmatpush1.msra.mxu0 0.0
      %622 = vmatprep.subr.mxu0 0.0
      %623 = vmatpush1.msra.mxu0 0.0
      %624 = vmatprep.subr.mxu0 0.0
      %625 = vmatpush1.msra.mxu0 %v578
      %626 = vmatprep.subr.mxu0 0.0
      %627 = vmatpush1.msra.mxu0 %v575
      %628 = vmatprep.subr.mxu0 0.0
      %629 = vmatpush1.msra.mxu0 %v572
      %630 = vmatprep.subr.mxu0 0.0
      %631 = vmatpush1.msra.mxu0 %v569
      %632 = vmatprep.subr.mxu0 0.0
      %633 = vmatpush2.msra.mxu0 0.0
      %634 = vmatprep.subr.mxu0 0.0
      %635 = vmatpush2.msra.mxu0 0.0
      %636 = vmatprep.subr.mxu0 0.0
      %637 = vmatpush2.msra.mxu0 0.0
      %638 = vmatprep.subr.mxu0 0.0
      %639 = vmatpush2.msra.mxu0 0.0
      %640 = vmatprep.subr.mxu0 0.0
      %641 = vmatpush2.msra.mxu0 0.0
      %642 = vmatprep.subr.mxu0 0.0
      %643 = vmatpush2.msra.mxu0 0.0
      %644 = vmatprep.subr.mxu0 0.0
      %645 = vmatpush2.msra.mxu0 0.0
      %646 = vmatprep.subr.mxu0 0.0
      %647 = vmatpush2.msra.mxu0 0.0
      %648 = vmatprep.subr.mxu0 0.0
      %649 = vmatpush2.msra.mxu0 0.0
      %650 = vmatprep.subr.mxu0 0.0
      %651 = vmatpush2.msra.mxu0 0.0
      %652 = vmatprep.subr.mxu0 0.0
      %653 = vmatpush2.msra.mxu0 0.0
      %654 = vmatprep.subr.mxu0 0.0
      %655 = vmatpush2.msra.mxu0 0.0
      %656 = vmatprep.subr.mxu0 0.0
      %657 = vmatpush2.msra.mxu0 0.0
      %658 = vmatprep.subr.mxu0 0.0
      %659 = vmatpush2.msra.mxu0 0.0
      %660 = vmatprep.subr.mxu0 0.0
      %661 = vmatpush2.msra.mxu0 0.0
      %662 = vmatprep.subr.mxu0 0.0
      %663 = vmatpush2.msra.mxu0 0.0
      %664 = vmatprep.mubr.f32.mxu0 0.0
      %665 = vmatmul.mubr.f32.gmra.mxu0 %v595
      %v666 = vpop.f32.mrf.mxu0
      %v667 = vadd.f32 %v587, %v666
      %v668 = vpop.f32.mrf.mxu0
      %669 = vmatprep.mubr.f32.mxu0 0.0
      %670 = vmatmul.mubr.f32.gmra.mxu0 %v598
      %v671 = vpop.f32.mrf.mxu0
      %v672 = vadd.f32 %v592, %v671
      %v673 = vpop.f32.mrf.mxu0
      %674 = vdwg.mxu0
      %v675 = vtanh.pop %v667
      %v676 = vtanh.pop %v672
      %679 = vrot.lane.b32.xlu0 %v675, 127
      %v680 = vpop.permute.xlu0 %679
      %681 = vrot.lane.b32.xlu0 %v676, 127
      %v682 = vpop.permute.xlu0 %681
      %685 = vrot.lane.b32.xlu0 %v675, 126
      %v686 = vpop.permute.xlu0 %685
      %687 = vrot.lane.b32.xlu0 %v676, 126
      %v688 = vpop.permute.xlu0 %687
      %691 = vrot.lane.b32.xlu0 %v675, 125
      %v692 = vpop.permute.xlu0 %691
      %693 = vrot.lane.b32.xlu0 %v676, 125
      %v694 = vpop.permute.xlu0 %693
      %v697 = vld [vmem:[%s7] sm:$0xff]
      %v698 = vld [vmem:[%s7 + $0x8] sm:$0xff]
      %v699 = vld [vmem:[%s8] sm:$0xff]
      %v700 = vld [vmem:[%s8 + $0x8] sm:$0xff]
      %vm701 = vcmask 523264
      %v703 = vsel %vm701, %v697, 0
      %v706 = vsel %vm701, %v698, 0
      %708 = vmatprep.subr.mxu0 0.0
      %709 = vmatpush1.msra.mxu0 0.0
      %710 = vmatprep.subr.mxu0 0.0
      %711 = vmatpush1.msra.mxu0 0.0
      %712 = vmatprep.subr.mxu0 0.0
      %713 = vmatpush1.msra.mxu0 0.0
      %714 = vmatprep.subr.mxu0 0.0
      %715 = vmatpush1.msra.mxu0 0.0
      %716 = vmatprep.subr.mxu0 0.0
      %717 = vmatpush1.msra.mxu0 0.0
      %718 = vmatprep.subr.mxu0 0.0
      %719 = vmatpush1.msra.mxu0 0.0
      %720 = vmatprep.subr.mxu0 0.0
      %721 = vmatpush1.msra.mxu0 0.0
      %722 = vmatprep.subr.mxu0 0.0
      %723 = vmatpush1.msra.mxu0 0.0
      %724 = vmatprep.subr.mxu0 0.0
      %725 = vmatpush1.msra.mxu0 %v694
      %726 = vmatprep.subr.mxu0 0.0
      %727 = vmatpush1.msra.mxu0 %v692
      %728 = vmatprep.subr.mxu0 0.0
      %729 = vmatpush1.msra.mxu0 %v688
      %730 = vmatprep.subr.mxu0 0.0
      %731 = vmatpush1.msra.mxu0 %v686
      %732 = vmatprep.subr.mxu0 0.0
      %733 = vmatpush1.msra.mxu0 %v682
      %734 = vmatprep.subr.mxu0 0.0
      %735 = vmatpush1.msra.mxu0 %v680
      %736 = vmatprep.subr.mxu0 0.0
      %737 = vmatpush1.msra.mxu0 %v676
      %738 = vmatprep.subr.mxu0 0.0
      %739 = vmatpush1.msra.mxu0 %v675
      %740 = vmatprep.subr.mxu0 0.0
      %741 = vmatpush2.msra.mxu0 0.0
      %742 = vmatprep.subr.mxu0 0.0
      %743 = vmatpush2.msra.mxu0 0.0
      %744 = vmatprep.subr.mxu0 0.0
      %745 = vmatpush2.msra.mxu0 0.0
      %746 = vmatprep.subr.mxu0 0.0
      %747 = vmatpush2.msra.mxu0 0.0
      %748 = vmatprep.subr.mxu0 0.0
      %749 = vmatpush2.msra.mxu0 0.0
      %750 = vmatprep.subr.mxu0 0.0
      %751 = vmatpush2.msra.mxu0 0.0
      %752 = vmatprep.subr.mxu0 0.0
      %753 = vmatpush2.msra.mxu0 0.0
      %754 = vmatprep.subr.mxu0 0.0
      %755 = vmatpush2.msra.mxu0 0.0
      %756 = vmatprep.subr.mxu0 0.0
      %757 = vmatpush2.msra.mxu0 0.0
      %758 = vmatprep.subr.mxu0 0.0
      %759 = vmatpush2.msra.mxu0 0.0
      %760 = vmatprep.subr.mxu0 0.0
      %761 = vmatpush2.msra.mxu0 0.0
      %762 = vmatprep.subr.mxu0 0.0
      %763 = vmatpush2.msra.mxu0 0.0
      %764 = vmatprep.subr.mxu0 0.0
      %765 = vmatpush2.msra.mxu0 0.0
      %766 = vmatprep.subr.mxu0 0.0
      %767 = vmatpush2.msra.mxu0 0.0
      %768 = vmatprep.subr.mxu0 0.0
      %769 = vmatpush2.msra.mxu0 0.0
      %770 = vmatprep.subr.mxu0 0.0
      %771 = vmatpush2.msra.mxu0 0.0
      %772 = vmatprep.mubr.f32.mxu0 0.0
      %773 = vmatmul.mubr.f32.gmra.mxu0 %v703
      %v774 = vpop.f32.mrf.mxu0
      %v775 = vadd.f32 %v699, %v774
      %v776 = vpop.f32.mrf.mxu0
      %777 = vmatprep.mubr.f32.mxu0 0.0
      %778 = vmatmul.mubr.f32.gmra.mxu0 %v706
      %v779 = vpop.f32.mrf.mxu0
      %v780 = vadd.f32 %v700, %v779
      %v781 = vpop.f32.mrf.mxu0
      %782 = vdwg.mxu0
      %v783 = vtanh.pop %v775
      %v784 = vtanh.pop %v780
      %v785 = vld [vmem:[%s9] sm:$0xff]
      %v786 = vld [vmem:[%s9 + $0x8] sm:$0xff]
      %v787 = vld [vmem:[%s10] sm:$0xff]
      %v788 = vld [vmem:[%s10 + $0x8] sm:$0xff]
      %vm789 = vcmask 130048
      %v791 = vsel %vm789, %v785, 0
      %v794 = vsel %vm789, %v786, 0
      %796 = vmatprep.subr.mxu0 0.0
      %797 = vmatpush1.msra.mxu0 0.0
      %798 = vmatprep.subr.mxu0 0.0
      %799 = vmatpush1.msra.mxu0 0.0
      %800 = vmatprep.subr.mxu0 0.0
      %801 = vmatpush1.msra.mxu0 0.0
      %802 = vmatprep.subr.mxu0 0.0
      %803 = vmatpush1.msra.mxu0 0.0
      %804 = vmatprep.subr.mxu0 0.0
      %805 = vmatpush1.msra.mxu0 0.0
      %806 = vmatprep.subr.mxu0 0.0
      %807 = vmatpush1.msra.mxu0 0.0
      %808 = vmatprep.subr.mxu0 0.0
      %809 = vmatpush1.msra.mxu0 0.0
      %810 = vmatprep.subr.mxu0 0.0
      %811 = vmatpush1.msra.mxu0 0.0
      %812 = vmatprep.subr.mxu0 0.0
      %813 = vmatpush1.msra.mxu0 0.0
      %814 = vmatprep.subr.mxu0 0.0
      %815 = vmatpush1.msra.mxu0 0.0
      %816 = vmatprep.subr.mxu0 0.0
      %817 = vmatpush1.msra.mxu0 0.0
      %818 = vmatprep.subr.mxu0 0.0
      %819 = vmatpush1.msra.mxu0 0.0
      %820 = vmatprep.subr.mxu0 0.0
      %821 = vmatpush1.msra.mxu0 0.0
      %822 = vmatprep.subr.mxu0 0.0
      %823 = vmatpush1.msra.mxu0 0.0
      %824 = vmatprep.subr.mxu0 0.0
      %825 = vmatpush1.msra.mxu0 %v784
      %826 = vmatprep.subr.mxu0 0.0
      %827 = vmatpush1.msra.mxu0 %v783
      %828 = vmatprep.subr.mxu0 0.0
      %829 = vmatpush2.msra.mxu0 0.0
      %830 = vmatprep.subr.mxu0 0.0
      %831 = vmatpush2.msra.mxu0 0.0
      %832 = vmatprep.subr.mxu0 0.0
      %833 = vmatpush2.msra.mxu0 0.0
      %834 = vmatprep.subr.mxu0 0.0
      %835 = vmatpush2.msra.mxu0 0.0
      %836 = vmatprep.subr.mxu0 0.0
      %837 = vmatpush2.msra.mxu0 0.0
      %838 = vmatprep.subr.mxu0 0.0
      %839 = vmatpush2.msra.mxu0 0.0
      %840 = vmatprep.subr.mxu0 0.0
      %841 = vmatpush2.msra.mxu0 0.0
      %842 = vmatprep.subr.mxu0 0.0
      %843 = vmatpush2.msra.mxu0 0.0
      %844 = vmatprep.subr.mxu0 0.0
      %845 = vmatpush2.msra.mxu0 0.0
      %846 = vmatprep.subr.mxu0 0.0
      %847 = vmatpush2.msra.mxu0 0.0
      %848 = vmatprep.subr.mxu0 0.0
      %849 = vmatpush2.msra.mxu0 0.0
      %850 = vmatprep.subr.mxu0 0.0
      %851 = vmatpush2.msra.mxu0 0.0
      %852 = vmatprep.subr.mxu0 0.0
      %853 = vmatpush2.msra.mxu0 0.0
      %854 = vmatprep.subr.mxu0 0.0
      %855 = vmatpush2.msra.mxu0 0.0
      %856 = vmatprep.subr.mxu0 0.0
      %857 = vmatpush2.msra.mxu0 0.0
      %858 = vmatprep.subr.mxu0 0.0
      %859 = vmatpush2.msra.mxu0 0.0
      %860 = vmatprep.mubr.f32.mxu0 0.0
      %861 = vmatmul.mubr.f32.gmra.mxu0 %v791
      %v862 = vpop.f32.mrf.mxu0
      %v863 = vadd.f32 %v787, %v862
      %v864 = vpop.f32.mrf.mxu0
      %865 = vmatprep.mubr.f32.mxu0 0.0
      %866 = vmatmul.mubr.f32.gmra.mxu0 %v794
      %v867 = vpop.f32.mrf.mxu0
      %v868 = vadd.f32 %v788, %v867
      %v869 = vpop.f32.mrf.mxu0
      %870 = vdwg.mxu0
      %vm871 = vcmask 7168
      %872 = vst.msk [vmem:[%s386] sm:$0xff] %vm871, %v863
      %873 = vst.msk [vmem:[%s386 + $0x8] sm:$0xff] %vm871, %v868
      %p874 = scmp.lt.s32.totalorder %s22, 1
      %s875 = scalar_select %p874, %s22, 1
      %s876 = smul.addr %s875, 2
      %s877 = smul.addr %s876, 8
      %s878 = scalar_lea.vmem %s11, %s877
      // Predicated region
      $region65: #{encoder2d_forward.1} parent=63 // pred_check
        %p879 = pneg %p276
      $region66: #{encoder2d_forward.1} parent=63 // pred_check_branch
        %881 = sbr.rel (%p879) target = $region68
      $region67: #{encoder2d_forward.1} parent=63 // pred_region
        _
      $region68: #{encoder2d_forward.1} parent=63 // pred_fallthru
        _
    $region64: #{encoder2d_forward.1} parent=5 // pred_fallthru
      _
    %p882 = scmp.le.s32.totalorder 2, %s17
    // Predicated region
    $region69: #{encoder2d_forward.1} parent=5 // pred_check
      %p883 = pneg %p882
    $region70: #{encoder2d_forward.1} parent=5 // pred_check_branch
      %885 = sbr.rel (%p883) target = $region72
    $region71: #{encoder2d_forward.1} parent=5 // pred_region
      %s886 = ssub.s32 %s17, 2
      // Predicated region
      $region73: #{encoder2d_forward.1} parent=71 // pred_check
        %p887 = pneg %p282
      $region74: #{encoder2d_forward.1} parent=71 // pred_check_branch
        %889 = sbr.rel (%p887) target = $region76
      $region75: #{encoder2d_forward.1} parent=71 // pred_region
        %p890 = scmp.lt.s32.totalorder %s23, 1
        %s891 = scalar_select %p890, %s23, 1
        %s892 = smul.addr %s891, 2
        %s893 = smul.addr %s892, 8
        %s894 = scalar_lea.vmem %s11, %s893
      $region76: #{encoder2d_forward.1} parent=71 // pred_fallthru
        _
    $region72: #{encoder2d_forward.1} parent=5 // pred_fallthru
      _
  $region6: #{encoder2d_forward.1} parent=0 // loop_footer
    %s21 = sadd.s32 1, %s17
  $region7: #{encoder2d_forward.1} parent=0 // loop_footer_branch
    %16 = sbr.rel target = $region3
  $region8: #{encoder2d_forward.1} parent=0 // loop_exit
    _

</llo_original>
